<compile_context>
chip_gen: v5e
topology: v5e:2x2
jax: 0.10.0
libtpu: 0.0.40
codegen_flags: <defaults>
</compile_context>

<pallas_src>
import functools

import jax
import jax.numpy as jnp
from jax.experimental import pallas as pl
from jax.experimental.pallas import tpu as pltpu


# ----------------------------------------------------------------------------
# Pallas kernel: full GNN forward, gridded over the classifier output dim.
# ----------------------------------------------------------------------------
def gnn_kernel(a_ref, x_ref, w1_ref, b1_ref, w2_ref, b2_ref, p_ref,
               w3_ref, b3_ref, o_ref, *, aggregate_first):
    a = a_ref[...]                                                    # (N, N)

    # GCNConv 1:  A_hat @ X @ W1 + b1
    # Association is chosen statically:  (A_hat @ X) @ W1 is cheaper when
    # F < H;  A_hat @ (X @ W1) is cheaper when F > H.  Bias is added after
    # aggregation either way (matches PyG).
    if aggregate_first:
        h = jnp.dot(a, x_ref[...], preferred_element_type=jnp.float32)    # (N, F)
        h = jnp.dot(h, w1_ref[...], preferred_element_type=jnp.float32)   # (N, H)
    else:
        h = jnp.dot(x_ref[...], w1_ref[...], preferred_element_type=jnp.float32)
        h = jnp.dot(a, h, preferred_element_type=jnp.float32)
    h = jnp.maximum(h + b1_ref[...], 0.0)                             # bias + ReLU

    # GCNConv 2:  A_hat @ H @ W2 + b2   (H == hidden both sides; order moot)
    h = jnp.dot(a, h, preferred_element_type=jnp.float32)             # (N, H)
    h = jnp.dot(h, w2_ref[...], preferred_element_type=jnp.float32)   # (N, H)
    h = h + b2_ref[...]

    # global_mean_pool:  P @ H   (P rows are 1/|graph|, zero rows for padding)
    pooled = jnp.dot(p_ref[...], h, preferred_element_type=jnp.float32)  # (Gp, H)

    # Linear (current O tile): pooled @ W3[:, tile] + b3[:, tile]
    # W3 tile is bf16 (HBM-bandwidth bound operand); accumulate in f32.
    out = jnp.dot(pooled.astype(jnp.bfloat16), w3_ref[...],
                  preferred_element_type=jnp.float32)                 # (Gp, TO)
    o_ref[...] = out + b3_ref[...]


def gnn_forward(a_hat, x, w1, b1, w2, b2, pool, w3, b3, *, tile_o=2304):
    """Runs the full GNN forward.  Returns (num_graphs, out_dim) float32."""
    n_nodes, n_feat = x.shape
    n_graphs = pool.shape[0]
    hidden, out_dim = w3.shape

    # --- padding for lane/sublane-dense stores -------------------------------
    g_pad = max(8, ((n_graphs + 7) // 8) * 8)           # sublane-dense rows
    o_pad = ((out_dim + tile_o - 1) // tile_o) * tile_o  # lane-dense columns

    pool_p = jnp.zeros((g_pad, n_nodes), jnp.float32).at[:n_graphs].set(pool)
    w3_p = jnp.zeros((hidden, o_pad), jnp.bfloat16).at[:, :out_dim].set(
        w3.astype(jnp.bfloat16))
    b3_p = jnp.zeros((1, o_pad), jnp.float32).at[:, :out_dim].set(b3)

    grid = (o_pad // tile_o,)

    # Small operands stay fully resident in VMEM (block index never changes,
    # so they are DMA'd once); W3 / b3 / out are tiled over the grid.
    def full(shape):
        return pl.BlockSpec(shape, lambda j: (0, 0))

    kernel = functools.partial(gnn_kernel, aggregate_first=(n_feat < hidden))

    out = pl.pallas_call(
        kernel,
        out_shape=jax.ShapeDtypeStruct((g_pad, o_pad), jnp.float32),
        grid=grid,
        in_specs=[
            full(a_hat.shape),                                # A_hat  (N, N)
            full(x.shape),                                    # X      (N, F)
            full(w1.shape), full(b1.shape),                   # W1, b1
            full(w2.shape), full(b2.shape),                   # W2, b2
            full(pool_p.shape),                               # P      (Gp, N)
            pl.BlockSpec((hidden, tile_o), lambda j: (0, j)),  # W3 tile (bf16)
            pl.BlockSpec((1, tile_o), lambda j: (0, j)),       # b3 tile
        ],
        out_specs=pl.BlockSpec((g_pad, tile_o), lambda j: (0, j)),
        compiler_params=pltpu.CompilerParams(
            dimension_semantics=("parallel",)),               # v7x: 2 TCs split O
    )(a_hat, x, w1, b1, w2, b2, pool_p, w3_p, b3_p)

    return out[:n_graphs, :out_dim]


# ----------------------------------------------------------------------------
# Plain-JAX glue: graph structure -> dense normalized adjacency / pool matrix
# ----------------------------------------------------------------------------
def build_normalized_adjacency(edge_index, num_nodes):
    """A_hat = D^-1/2 (A + I) D^-1/2, with A[dst, src] += 1 (message j -> i).

    Uses scatter-add so duplicate edges are counted like PyG's gcn_norm.
    """
    src, dst = edge_index[0], edge_index[1]
    a = jnp.zeros((num_nodes, num_nodes), jnp.float32).at[dst, src].add(1.0)
    a = a + jnp.eye(num_nodes, dtype=jnp.float32)        # self loops
    deg = a.sum(axis=1)
    dinv = jnp.where(deg > 0, 1.0 / jnp.sqrt(deg), 0.0)
    return dinv[:, None] * a * dinv[None, :]


def build_mean_pool_matrix(batch, num_graphs, num_nodes):
    onehot = (batch[None, :] == jnp.arange(num_graphs)[:, None]).astype(jnp.float32)
    counts = onehot.sum(axis=1, keepdims=True)
    return onehot / jnp.maximum(counts, 1.0)


# ----------------------------------------------------------------------------
# Deterministic parameter init (Glorot-ish uniform, like PyG / nn.Linear)
# ----------------------------------------------------------------------------
def init_params(key, num_node_features, hidden_channels, output_size):
    k1, k2, k3, k4 = jax.random.split(key, 4)

    def glorot(k, fan_in, fan_out):
        lim = (6.0 / (fan_in + fan_out)) ** 0.5
        return jax.random.uniform(k, (fan_in, fan_out), jnp.float32, -lim, lim)

    w1 = glorot(k1, num_node_features, hidden_channels)
    b1 = jnp.zeros((1, hidden_channels), jnp.float32)
    w2 = glorot(k2, hidden_channels, hidden_channels)
    b2 = jnp.zeros((1, hidden_channels), jnp.float32)
    w3 = glorot(k3, hidden_channels, output_size)
    lim = 1.0 / (hidden_channels ** 0.5)
    b3 = jax.random.uniform(k4, (1, output_size), jnp.float32, -lim, lim)
    return w1, b1, w2, b2, w3, b3


if __name__ == "__main__":
    # Small shapes consistent with the module's forward.
    num_nodes = 16
    num_node_features = 4
    hidden_channels = 32
    output_size = 9044          # matches the module's global constant
    num_graphs = 2

    key = jax.random.PRNGKey(0)
    kx, kp = jax.random.split(key)

    # Node features
    x = jax.random.normal(kx, (num_nodes, num_node_features), jnp.float32)

    # Two 8-node ring graphs (undirected edges both directions), batched.
    def ring_edges(offset, n):
        s = jnp.arange(n) + offset
        d = (jnp.arange(n) + 1) % n + offset
        return jnp.stack([jnp.concatenate([s, d]), jnp.concatenate([d, s])])

    e0 = ring_edges(0, 8)
    e1 = ring_edges(8, 8)
    edge_index = jnp.concatenate([e0, e1], axis=1)          # (2, E)
    batch = jnp.concatenate([jnp.zeros(8, jnp.int32),
                             jnp.ones(8, jnp.int32)])       # (N,)

    # Graph-structure glue (plain JAX)
    a_hat = build_normalized_adjacency(edge_index, num_nodes)        # (N, N)
    pool = build_mean_pool_matrix(batch, num_graphs, num_nodes)      # (G, N)

    # Parameters
    w1, b1, w2, b2, w3, b3 = init_params(
        kp, num_node_features, hidden_channels, output_size)

    # Run the Pallas kernel
    out = gnn_forward(a_hat, x, w1, b1, w2, b2, pool, w3, b3)
    out = jax.block_until_ready(out)

    assert out.shape == (num_graphs, output_size), out.shape
    assert bool(jnp.isfinite(out).all())
    print("KERNEL_OK")
</pallas_src>

<mosaic_0001>
module attributes {stable_mosaic.version = 11 : i64} {
  func.func @gnn_kernel(%arg0: i32, %arg1: memref<16x16xf32, #tpu.memory_space<vmem>>, %arg2: memref<16x4xf32, #tpu.memory_space<vmem>>, %arg3: memref<4x32xf32, #tpu.memory_space<vmem>>, %arg4: memref<1x32xf32, #tpu.memory_space<vmem>>, %arg5: memref<32x32xf32, #tpu.memory_space<vmem>>, %arg6: memref<1x32xf32, #tpu.memory_space<vmem>>, %arg7: memref<8x16xf32, #tpu.memory_space<vmem>>, %arg8: memref<32x2304xbf16, #tpu.memory_space<vmem>>, %arg9: memref<1x2304xf32, #tpu.memory_space<vmem>>, %arg10: memref<8x2304xf32, #tpu.memory_space<vmem>>) attributes {dimension_semantics = [#tpu.dimension_semantics<parallel>], iteration_bounds = array<i64: 4>, scalar_prefetch = 0 : i64, scratch_operands = 0 : i64, tpu.core_type = #tpu.core_type<tc>, window_params = [{pipeline_mode = #tpu.pipeline_mode<synchronous>, transform_indices = @transform_0, window_bounds = array<i64: 16, 16>}, {pipeline_mode = #tpu.pipeline_mode<synchronous>, transform_indices = @transform_1, window_bounds = array<i64: 16, 4>}, {pipeline_mode = #tpu.pipeline_mode<synchronous>, transform_indices = @transform_2, window_bounds = array<i64: 4, 32>}, {pipeline_mode = #tpu.pipeline_mode<synchronous>, transform_indices = @transform_3, window_bounds = array<i64: 1, 32>}, {pipeline_mode = #tpu.pipeline_mode<synchronous>, transform_indices = @transform_4, window_bounds = array<i64: 32, 32>}, {pipeline_mode = #tpu.pipeline_mode<synchronous>, transform_indices = @transform_5, window_bounds = array<i64: 1, 32>}, {pipeline_mode = #tpu.pipeline_mode<synchronous>, transform_indices = @transform_6, window_bounds = array<i64: 8, 16>}, {transform_indices = @transform_7, window_bounds = array<i64: 32, 2304>}, {transform_indices = @transform_8, window_bounds = array<i64: 1, 2304>}, {transform_indices = @transform_9, window_bounds = array<i64: 8, 2304>}]} {
    %c0 = arith.constant 0 : index
    %c0_0 = arith.constant 0 : index
    %0 = vector.load %arg1[%c0, %c0_0] : memref<16x16xf32, #tpu.memory_space<vmem>>, vector<16x16xf32>
    %c0_1 = arith.constant 0 : index
    %c0_2 = arith.constant 0 : index
    %1 = vector.load %arg2[%c0_1, %c0_2] : memref<16x4xf32, #tpu.memory_space<vmem>>, vector<16x4xf32>
    %cst = arith.constant dense<0.000000e+00> : vector<16x4xf32>
    %2 = tpu.matmul %0, %1, %cst {dimension_numbers = #tpu.dot_dimension_numbers<[1], [0], [0], [1], [0, 0, 1, 1], [], []>} : vector<16x16xf32>, vector<16x4xf32>, vector<16x4xf32> -> vector<16x4xf32>
    %c0_3 = arith.constant 0 : index
    %c0_4 = arith.constant 0 : index
    %3 = vector.load %arg3[%c0_3, %c0_4] : memref<4x32xf32, #tpu.memory_space<vmem>>, vector<4x32xf32>
    %cst_5 = arith.constant dense<0.000000e+00> : vector<16x32xf32>
    %4 = tpu.matmul %2, %3, %cst_5 {dimension_numbers = #tpu.dot_dimension_numbers<[1], [0], [0], [1], [0, 0, 1, 1], [], []>} : vector<16x4xf32>, vector<4x32xf32>, vector<16x32xf32> -> vector<16x32xf32>
    %c0_6 = arith.constant 0 : index
    %c0_7 = arith.constant 0 : index
    %5 = vector.load %arg4[%c0_6, %c0_7] : memref<1x32xf32, #tpu.memory_space<vmem>>, vector<1x32xf32>
    %6 = vector.broadcast %5 : vector<1x32xf32> to vector<16x32xf32>
    %7 = arith.addf %4, %6 : vector<16x32xf32>
    %cst_8 = arith.constant 0.000000e+00 : f32
    %8 = vector.broadcast %cst_8 : f32 to vector<16x32xf32>
    %9 = arith.maximumf %7, %8 : vector<16x32xf32>
    %cst_9 = arith.constant dense<0.000000e+00> : vector<16x32xf32>
    %10 = tpu.matmul %0, %9, %cst_9 {dimension_numbers = #tpu.dot_dimension_numbers<[1], [0], [0], [1], [0, 0, 1, 1], [], []>} : vector<16x16xf32>, vector<16x32xf32>, vector<16x32xf32> -> vector<16x32xf32>
    %c0_10 = arith.constant 0 : index
    %c0_11 = arith.constant 0 : index
    %11 = vector.load %arg5[%c0_10, %c0_11] : memref<32x32xf32, #tpu.memory_space<vmem>>, vector<32x32xf32>
    %cst_12 = arith.constant dense<0.000000e+00> : vector<16x32xf32>
    %12 = tpu.matmul %10, %11, %cst_12 {dimension_numbers = #tpu.dot_dimension_numbers<[1], [0], [0], [1], [0, 0, 1, 1], [], []>} : vector<16x32xf32>, vector<32x32xf32>, vector<16x32xf32> -> vector<16x32xf32>
    %c0_13 = arith.constant 0 : index
    %c0_14 = arith.constant 0 : index
    %13 = vector.load %arg6[%c0_13, %c0_14] : memref<1x32xf32, #tpu.memory_space<vmem>>, vector<1x32xf32>
    %14 = vector.broadcast %13 : vector<1x32xf32> to vector<16x32xf32>
    %15 = arith.addf %12, %14 : vector<16x32xf32>
    %c0_15 = arith.constant 0 : index
    %c0_16 = arith.constant 0 : index
    %16 = vector.load %arg7[%c0_15, %c0_16] : memref<8x16xf32, #tpu.memory_space<vmem>>, vector<8x16xf32>
    %cst_17 = arith.constant dense<0.000000e+00> : vector<8x32xf32>
    %17 = tpu.matmul %16, %15, %cst_17 {dimension_numbers = #tpu.dot_dimension_numbers<[1], [0], [0], [1], [0, 0, 1, 1], [], []>} : vector<8x16xf32>, vector<16x32xf32>, vector<8x32xf32> -> vector<8x32xf32>
    %18 = arith.truncf %17 : vector<8x32xf32> to vector<8x32xbf16>
    %c0_18 = arith.constant 0 : index
    %c0_19 = arith.constant 0 : index
    %19 = vector.load %arg8[%c0_18, %c0_19] : memref<32x2304xbf16, #tpu.memory_space<vmem>>, vector<32x2304xbf16>
    %cst_20 = arith.constant dense<0.000000e+00> : vector<8x2304xf32>
    %20 = tpu.matmul %18, %19, %cst_20 {dimension_numbers = #tpu.dot_dimension_numbers<[1], [0], [0], [1], [0, 0, 1, 1], [], []>} : vector<8x32xbf16>, vector<32x2304xbf16>, vector<8x2304xf32> -> vector<8x2304xf32>
    %c0_21 = arith.constant 0 : index
    %c0_22 = arith.constant 0 : index
    %21 = vector.load %arg9[%c0_21, %c0_22] : memref<1x2304xf32, #tpu.memory_space<vmem>>, vector<1x2304xf32>
    %22 = vector.broadcast %21 : vector<1x2304xf32> to vector<8x2304xf32>
    %23 = arith.addf %20, %22 : vector<8x2304xf32>
    %c0_23 = arith.constant 0 : index
    %c0_24 = arith.constant 0 : index
    %24 = vector.load %arg10[%c0_23, %c0_24] : memref<8x2304xf32, #tpu.memory_space<vmem>>, vector<8x2304xf32>
    tpu.vector_store %arg10[%c0_23, %c0_24], %23 {strides = array<i32>} : memref<8x2304xf32, #tpu.memory_space<vmem>>, vector<8x2304xf32>,
    return
  }
  func.func @transform_0(%arg0: i32) -> (i32, i32) {
    %c0_i32 = arith.constant 0 : i32
    %c0_i32_0 = arith.constant 0 : i32
    %c0_i32_1 = arith.constant 0 : i32
    return %c0_i32, %c0_i32_0 : i32, i32
  }
  func.func @transform_1(%arg0: i32) -> (i32, i32) {
    %c0_i32 = arith.constant 0 : i32
    %c0_i32_0 = arith.constant 0 : i32
    %c0_i32_1 = arith.constant 0 : i32
    return %c0_i32, %c0_i32_0 : i32, i32
  }
  func.func @transform_2(%arg0: i32) -> (i32, i32) {
    %c0_i32 = arith.constant 0 : i32
    %c0_i32_0 = arith.constant 0 : i32
    %c0_i32_1 = arith.constant 0 : i32
    return %c0_i32, %c0_i32_0 : i32, i32
  }
  func.func @transform_3(%arg0: i32) -> (i32, i32) {
    %c0_i32 = arith.constant 0 : i32
    %c0_i32_0 = arith.constant 0 : i32
    %c0_i32_1 = arith.constant 0 : i32
    return %c0_i32, %c0_i32_0 : i32, i32
  }
  func.func @transform_4(%arg0: i32) -> (i32, i32) {
    %c0_i32 = arith.constant 0 : i32
    %c0_i32_0 = arith.constant 0 : i32
    %c0_i32_1 = arith.constant 0 : i32
    return %c0_i32, %c0_i32_0 : i32, i32
  }
  func.func @transform_5(%arg0: i32) -> (i32, i32) {
    %c0_i32 = arith.constant 0 : i32
    %c0_i32_0 = arith.constant 0 : i32
    %c0_i32_1 = arith.constant 0 : i32
    return %c0_i32, %c0_i32_0 : i32, i32
  }
  func.func @transform_6(%arg0: i32) -> (i32, i32) {
    %c0_i32 = arith.constant 0 : i32
    %c0_i32_0 = arith.constant 0 : i32
    %c0_i32_1 = arith.constant 0 : i32
    return %c0_i32, %c0_i32_0 : i32, i32
  }
  func.func @transform_7(%arg0: i32) -> (i32, i32) {
    %c0_i32 = arith.constant 0 : i32
    %c0_i32_0 = arith.constant 0 : i32
    return %c0_i32, %arg0 : i32, i32
  }
  func.func @transform_8(%arg0: i32) -> (i32, i32) {
    %c0_i32 = arith.constant 0 : i32
    %c0_i32_0 = arith.constant 0 : i32
    return %c0_i32, %arg0 : i32, i32
  }
  func.func @transform_9(%arg0: i32) -> (i32, i32) {
    %c0_i32 = arith.constant 0 : i32
    %c0_i32_0 = arith.constant 0 : i32
    return %c0_i32, %arg0 : i32, i32
  }
}

</mosaic_0001>

<llo_original>
// kernel: tpu_custom_call.1
$region0: #{tpu_custom_call.1}
  #allocation0 [shape = 'u32[]', space=smem, size = 0x4, offset = 0x4, fixed_abs, tag = 'smem constant byte address 0x4 - core index']
  #allocation1 [shape = 'u32[72,128]{1,0:T(1,128)}', space=vmem, size = 0x9000, scoped, tag = 'internal scratch']
  %s0 = inlined_call_operand.vmem [shape: f32[16,16], index: 0, kind: input, shape index: {}]
  %s1 = inlined_call_operand.vmem [shape: f32[16,4], index: 1, kind: input, shape index: {}]
  %s2 = inlined_call_operand.hbm [shape: f32[4,32], index: 2, kind: input, shape index: {}]
  %s3 = inlined_call_operand.hbm [shape: f32[1,32], index: 3, kind: input, shape index: {}]
  %s4 = inlined_call_operand.hbm [shape: f32[32,32], index: 4, kind: input, shape index: {}]
  %s5 = inlined_call_operand.hbm [shape: f32[1,32], index: 5, kind: input, shape index: {}]
  %s6 = inlined_call_operand.vmem [shape: f32[8,16], index: 6, kind: input, shape index: {}]
  %s7 = inlined_call_operand.hbm [shape: bf16[32,9216], index: 7, kind: input, shape index: {}]
  %s8 = inlined_call_operand.hbm [shape: f32[1,9216], index: 8, kind: input, shape index: {}]
  %s9 = inlined_call_operand.hbm [shape: f32[8,9216], index: 9, kind: output, shape index: {}]
  %s10 = sld [smem:[#allocation0]]
  $region93: #{tpu_custom_call.1} parent=0
    _
  %s12 = ssub.s32 1, %s10
  %s13 = scalar_select 0, %s12, %s10
  $region1: #{tpu_custom_call.1} parent=0
    #allocation2 [shape = 'u8[2048]{0}', space=vmem, size = 0x800, scoped, tag = 'input window, operand 2, single buffered']
    #allocation3 [shape = 's32[2]{0}', space=sflag, size = 0x8, scoped, tag = 'scoped memory for tpu_custom_call.1']
    #allocation4 [shape = 's32[2]{0}', space=sflag, size = 0x8, scoped, tag = 'scoped memory for tpu_custom_call.1']
    #allocation5 [shape = 'u8[512]{0}', space=vmem, size = 0x400, scoped, tag = 'input window, operand 3, single buffered']
    #allocation6 [shape = 's32[1]{0}', space=sflag, size = 0x4, scoped, tag = 'scoped memory for tpu_custom_call.1']
    #allocation7 [shape = 'u8[16384]{0}', space=vmem, size = 0x4000, scoped, tag = 'input window, operand 4, single buffered']
    #allocation8 [shape = 'u8[512]{0}', space=vmem, size = 0x400, scoped, tag = 'input window, operand 5, single buffered']
    #allocation9 [shape = 's32[1]{0}', space=sflag, size = 0x4, scoped, tag = 'scoped memory for tpu_custom_call.1']
    #allocation10 [shape = 'u8[294912]{0}', space=vmem, size = 0x48000, scoped, tag = 'input window, operand 7']
    #allocation11 [shape = 'u8[18432]{0}', space=vmem, size = 0x4800, scoped, tag = 'input window, operand 8']
    #allocation12 [shape = 'u8[147456]{0}', space=vmem, size = 0x24000, scoped, tag = 'output window, operand 0']
    %14 = vsyncpa [#allocation3], 0
    %15 = vsyncpa [#allocation6], 0
    %16 = vsyncpa [#allocation9], 0
    %17 = vsyncpa [#allocation4], 0
    %s18 = scalar_lea.sflag [#allocation4], 1
    %19 = vsyncpa %s18, 0
    loop: start=0, step=1, limit=6
    $region2: #{tpu_custom_call.1} parent=1 // loop_pre_header
      _
    $region3: #{tpu_custom_call.1} parent=1 // loop_header
      %s21 = sphi 0, %s25
      %p22 = scmp.ge.s32.totalorder %s21, 6
      %s29 = sphi 0, %s29
      %s31 = sphi 0, %s29
      %s32 = sphi 0, %s31
      %s46 = sphi 0, %s32
      %s50 = sphi 0, %s50
      %s52 = sphi 0, %s50
      %s53 = sphi 0, %s52
      %s67 = sphi 0, %s53
      %s71 = sphi 0, %s71
      %s73 = sphi 0, %s71
      %s74 = sphi 0, %s73
      %s88 = sphi 0, %s74
      %s92 = sphi 0, %s92
      %s94 = sphi 0, %s92
      %s95 = sphi 0, %s94
      %s109 = sphi 0, %s95
      %s113 = sphi 0, %s113
      %s115 = sphi 0, %s113
      %s116 = sphi 0, %s115
      %s130 = sphi 0, %s116
      %s134 = sphi 0, %s134
      %s136 = sphi 0, %s134
      %s137 = sphi 0, %s136
      %s151 = sphi 0, %s137
      %s155 = sphi 0, %s155
      %s157 = sphi 0, %s155
      %s158 = sphi 0, %s157
      %s172 = sphi 0, %s158
      %s178 = sphi 0, %s180
      %s181 = sphi 0, %s178
      %s182 = sphi 0, %s181
      %s198 = sphi 0, %s182
      %s204 = sphi 0, %s206
      %s207 = sphi 0, %s204
      %s208 = sphi 0, %s207
      %s224 = sphi 0, %s208
      %s230 = sphi 0, %s232
      %s233 = sphi 0, %s230
      %s234 = sphi 0, %s233
      %s250 = sphi 0, %s234
    $region4: #{tpu_custom_call.1} parent=1 // loop_header_branch
      %24 = sbr.rel (%p22) target = $region8
    $region5: #{tpu_custom_call.1} parent=1 // loop_body
      %s26 = ssub.s32 %s21, 1
      %s27 = ssub.s32 %s21, 2
      %s28 = sadd.s32 %s21, 1
      %s30 = sadd.s32 %s29, 1
      %p33 = scmp.eq.s32.totalorder %s21, 3
      %p34 = scmp.ne.s32.totalorder %s29, %s31
      %p35 = scmp.eq.s32.totalorder %s21, 0
      %p36 = por %p34, %p35
      %p37 = scmp.ne.s32.totalorder %s29, %s31
      %p38 = scmp.eq.s32.totalorder %s26, 3
      %p39 = por %p37, %p38
      %p40 = scmp.ne.s32.totalorder %s31, %s32
      %p41 = scmp.eq.s32.totalorder %s26, 0
      %p42 = por %p40, %p41
      %p43 = scmp.ne.s32.totalorder %s31, %s32
      %p44 = scmp.eq.s32.totalorder %s27, 3
      %p45 = por %p43, %p44
      %p47 = scmp.ne.s32.totalorder %s32, %s46
      %p48 = scmp.eq.s32.totalorder %s27, 0
      %p49 = por %p47, %p48
      %s51 = sadd.s32 %s50, 1
      %p54 = scmp.eq.s32.totalorder %s21, 3
      %p55 = scmp.ne.s32.totalorder %s50, %s52
      %p56 = scmp.eq.s32.totalorder %s21, 0
      %p57 = por %p55, %p56
      %p58 = scmp.ne.s32.totalorder %s50, %s52
      %p59 = scmp.eq.s32.totalorder %s26, 3
      %p60 = por %p58, %p59
      %p61 = scmp.ne.s32.totalorder %s52, %s53
      %p62 = scmp.eq.s32.totalorder %s26, 0
      %p63 = por %p61, %p62
      %p64 = scmp.ne.s32.totalorder %s52, %s53
      %p65 = scmp.eq.s32.totalorder %s27, 3
      %p66 = por %p64, %p65
      %p68 = scmp.ne.s32.totalorder %s53, %s67
      %p69 = scmp.eq.s32.totalorder %s27, 0
      %p70 = por %p68, %p69
      %s72 = sadd.s32 %s71, 1
      %p75 = scmp.eq.s32.totalorder %s21, 3
      %p76 = scmp.ne.s32.totalorder %s71, %s73
      %p77 = scmp.eq.s32.totalorder %s21, 0
      %p78 = por %p76, %p77
      %p79 = scmp.ne.s32.totalorder %s71, %s73
      %p80 = scmp.eq.s32.totalorder %s26, 3
      %p81 = por %p79, %p80
      %p82 = scmp.ne.s32.totalorder %s73, %s74
      %p83 = scmp.eq.s32.totalorder %s26, 0
      %p84 = por %p82, %p83
      %p85 = scmp.ne.s32.totalorder %s73, %s74
      %p86 = scmp.eq.s32.totalorder %s27, 3
      %p87 = por %p85, %p86
      %p89 = scmp.ne.s32.totalorder %s74, %s88
      %p90 = scmp.eq.s32.totalorder %s27, 0
      %p91 = por %p89, %p90
      %s93 = sadd.s32 %s92, 1
      %p96 = scmp.eq.s32.totalorder %s21, 3
      %p97 = scmp.ne.s32.totalorder %s92, %s94
      %p98 = scmp.eq.s32.totalorder %s21, 0
      %p99 = por %p97, %p98
      %p100 = scmp.ne.s32.totalorder %s92, %s94
      %p101 = scmp.eq.s32.totalorder %s26, 3
      %p102 = por %p100, %p101
      %p103 = scmp.ne.s32.totalorder %s94, %s95
      %p104 = scmp.eq.s32.totalorder %s26, 0
      %p105 = por %p103, %p104
      %p106 = scmp.ne.s32.totalorder %s94, %s95
      %p107 = scmp.eq.s32.totalorder %s27, 3
      %p108 = por %p106, %p107
      %p110 = scmp.ne.s32.totalorder %s95, %s109
      %p111 = scmp.eq.s32.totalorder %s27, 0
      %p112 = por %p110, %p111
      %s114 = sadd.s32 %s113, 1
      %p117 = scmp.eq.s32.totalorder %s21, 3
      %p118 = scmp.ne.s32.totalorder %s113, %s115
      %p119 = scmp.eq.s32.totalorder %s21, 0
      %p120 = por %p118, %p119
      %p121 = scmp.ne.s32.totalorder %s113, %s115
      %p122 = scmp.eq.s32.totalorder %s26, 3
      %p123 = por %p121, %p122
      %p124 = scmp.ne.s32.totalorder %s115, %s116
      %p125 = scmp.eq.s32.totalorder %s26, 0
      %p126 = por %p124, %p125
      %p127 = scmp.ne.s32.totalorder %s115, %s116
      %p128 = scmp.eq.s32.totalorder %s27, 3
      %p129 = por %p127, %p128
      %p131 = scmp.ne.s32.totalorder %s116, %s130
      %p132 = scmp.eq.s32.totalorder %s27, 0
      %p133 = por %p131, %p132
      %s135 = sadd.s32 %s134, 1
      %p138 = scmp.eq.s32.totalorder %s21, 3
      %p139 = scmp.ne.s32.totalorder %s134, %s136
      %p140 = scmp.eq.s32.totalorder %s21, 0
      %p141 = por %p139, %p140
      %p142 = scmp.ne.s32.totalorder %s134, %s136
      %p143 = scmp.eq.s32.totalorder %s26, 3
      %p144 = por %p142, %p143
      %p145 = scmp.ne.s32.totalorder %s136, %s137
      %p146 = scmp.eq.s32.totalorder %s26, 0
      %p147 = por %p145, %p146
      %p148 = scmp.ne.s32.totalorder %s136, %s137
      %p149 = scmp.eq.s32.totalorder %s27, 3
      %p150 = por %p148, %p149
      %p152 = scmp.ne.s32.totalorder %s137, %s151
      %p153 = scmp.eq.s32.totalorder %s27, 0
      %p154 = por %p152, %p153
      %s156 = sadd.s32 %s155, 1
      %p159 = scmp.eq.s32.totalorder %s21, 3
      %p160 = scmp.ne.s32.totalorder %s155, %s157
      %p161 = scmp.eq.s32.totalorder %s21, 0
      %p162 = por %p160, %p161
      %p163 = scmp.ne.s32.totalorder %s155, %s157
      %p164 = scmp.eq.s32.totalorder %s26, 3
      %p165 = por %p163, %p164
      %p166 = scmp.ne.s32.totalorder %s157, %s158
      %p167 = scmp.eq.s32.totalorder %s26, 0
      %p168 = por %p166, %p167
      %p169 = scmp.ne.s32.totalorder %s157, %s158
      %p170 = scmp.eq.s32.totalorder %s27, 3
      %p171 = por %p169, %p170
      %p173 = scmp.ne.s32.totalorder %s158, %s172
      %p174 = scmp.eq.s32.totalorder %s27, 0
      %p175 = por %p173, %p174
      %s176 = ssub.s32 %s21, %s28
      %p177 = scmp.eq.s32.totalorder %s176, 0
      %s179 = sadd.s32 %s178, 1
      %s180 = scalar_select %p177, %s178, %s179
      %p183 = pneg %p177
      %p184 = scmp.eq.s32.totalorder %s21, 3
      %p185 = por %p183, %p184
      %p186 = scmp.ne.s32.totalorder %s178, %s181
      %p187 = scmp.eq.s32.totalorder %s21, 0
      %p188 = por %p186, %p187
      %p189 = scmp.ne.s32.totalorder %s178, %s181
      %p190 = scmp.eq.s32.totalorder %s26, 3
      %p191 = por %p189, %p190
      %p192 = scmp.ne.s32.totalorder %s181, %s182
      %p193 = scmp.eq.s32.totalorder %s26, 0
      %p194 = por %p192, %p193
      %p195 = scmp.ne.s32.totalorder %s181, %s182
      %p196 = scmp.eq.s32.totalorder %s27, 3
      %p197 = por %p195, %p196
      %p199 = scmp.ne.s32.totalorder %s182, %s198
      %p200 = scmp.eq.s32.totalorder %s27, 0
      %p201 = por %p199, %p200
      %s202 = ssub.s32 %s21, %s28
      %p203 = scmp.eq.s32.totalorder %s202, 0
      %s205 = sadd.s32 %s204, 1
      %s206 = scalar_select %p203, %s204, %s205
      %p209 = pneg %p203
      %p210 = scmp.eq.s32.totalorder %s21, 3
      %p211 = por %p209, %p210
      %p212 = scmp.ne.s32.totalorder %s204, %s207
      %p213 = scmp.eq.s32.totalorder %s21, 0
      %p214 = por %p212, %p213
      %p215 = scmp.ne.s32.totalorder %s204, %s207
      %p216 = scmp.eq.s32.totalorder %s26, 3
      %p217 = por %p215, %p216
      %p218 = scmp.ne.s32.totalorder %s207, %s208
      %p219 = scmp.eq.s32.totalorder %s26, 0
      %p220 = por %p218, %p219
      %p221 = scmp.ne.s32.totalorder %s207, %s208
      %p222 = scmp.eq.s32.totalorder %s27, 3
      %p223 = por %p221, %p222
      %p225 = scmp.ne.s32.totalorder %s208, %s224
      %p226 = scmp.eq.s32.totalorder %s27, 0
      %p227 = por %p225, %p226
      %s228 = ssub.s32 %s21, %s28
      %p229 = scmp.eq.s32.totalorder %s228, 0
      %s231 = sadd.s32 %s230, 1
      %s232 = scalar_select %p229, %s230, %s231
      %p235 = pneg %p229
      %p236 = scmp.eq.s32.totalorder %s21, 3
      %p237 = por %p235, %p236
      %p238 = scmp.ne.s32.totalorder %s230, %s233
      %p239 = scmp.eq.s32.totalorder %s21, 0
      %p240 = por %p238, %p239
      %p241 = scmp.ne.s32.totalorder %s230, %s233
      %p242 = scmp.eq.s32.totalorder %s26, 3
      %p243 = por %p241, %p242
      %p244 = scmp.ne.s32.totalorder %s233, %s234
      %p245 = scmp.eq.s32.totalorder %s26, 0
      %p246 = por %p244, %p245
      %p247 = scmp.ne.s32.totalorder %s233, %s234
      %p248 = scmp.eq.s32.totalorder %s27, 3
      %p249 = por %p247, %p248
      %p251 = scmp.ne.s32.totalorder %s234, %s250
      %p252 = scmp.eq.s32.totalorder %s27, 0
      %p253 = por %p251, %p252
      %p254 = scmp.le.s32.totalorder 1, %s21
      %p255 = scmp.lt.s32.totalorder %s21, 5
      %p256 = pnand %p254, %p255
      %p257 = pneg %p256
      // Predicated region
      $region9: #{tpu_custom_call.1} parent=5 // pred_check
        _
      $region10: #{tpu_custom_call.1} parent=5 // pred_check_branch
        %259 = sbr.rel (%p256) target = $region12
      $region11: #{tpu_custom_call.1} parent=5 // pred_region
        %s260 = ssub.s32 %s21, 1
        // Predicated region
        $region13: #{tpu_custom_call.1} parent=11 // pred_check
          %p261 = pneg %p42
        $region14: #{tpu_custom_call.1} parent=11 // pred_check_branch
          %263 = sbr.rel (%p261) target = $region16
        $region15: #{tpu_custom_call.1} parent=11 // pred_region
          _
        $region16: #{tpu_custom_call.1} parent=11 // pred_fallthru
          _
        // Predicated region
        $region17: #{tpu_custom_call.1} parent=11 // pred_check
          %p264 = pneg %p63
        $region18: #{tpu_custom_call.1} parent=11 // pred_check_branch
          %266 = sbr.rel (%p264) target = $region20
        $region19: #{tpu_custom_call.1} parent=11 // pred_region
          _
        $region20: #{tpu_custom_call.1} parent=11 // pred_fallthru
          _
        // Predicated region
        $region21: #{tpu_custom_call.1} parent=11 // pred_check
          %p267 = pneg %p84
        $region22: #{tpu_custom_call.1} parent=11 // pred_check_branch
          %269 = sbr.rel (%p267) target = $region24
        $region23: #{tpu_custom_call.1} parent=11 // pred_region
          %271 = vsyncadd [#allocation3], 0
          %s273 = sshll.u32 %s2, 4
          %s274 = int_to_ptr.hbm [resolvable:$true] %s273
          %s275 = sshll.u32 [#allocation2], 4
          %s276 = int_to_ptr.vmem [resolvable:$true] %s275
          %278 = dma.hbm_to_vmem [thread:$0]  %s274, 64, %s276, [#allocation3]
        $region24: #{tpu_custom_call.1} parent=11 // pred_fallthru
          _
        // Predicated region
        $region25: #{tpu_custom_call.1} parent=11 // pred_check
          %p279 = pneg %p105
        $region26: #{tpu_custom_call.1} parent=11 // pred_check_branch
          %281 = sbr.rel (%p279) target = $region28
        $region27: #{tpu_custom_call.1} parent=11 // pred_region
          %283 = vsyncadd [#allocation6], 0
          %s285 = sshll.u32 %s3, 4
          %s286 = int_to_ptr.hbm [resolvable:$true] %s285
          %s287 = sshll.u32 [#allocation5], 4
          %s288 = int_to_ptr.vmem [resolvable:$true] %s287
          %290 = dma.hbm_to_vmem [thread:$0]  %s286, 16, %s288, [#allocation6]
        $region28: #{tpu_custom_call.1} parent=11 // pred_fallthru
          _
        // Predicated region
        $region29: #{tpu_custom_call.1} parent=11 // pred_check
          %p291 = pneg %p126
        $region30: #{tpu_custom_call.1} parent=11 // pred_check_branch
          %293 = sbr.rel (%p291) target = $region32
        $region31: #{tpu_custom_call.1} parent=11 // pred_region
          %295 = vsyncadd [#allocation6], 0
          %s296 = sshll.u32 %s4, 4
          %s297 = int_to_ptr.hbm [resolvable:$true] %s296
          %s298 = sshll.u32 [#allocation7], 4
          %s299 = int_to_ptr.vmem [resolvable:$true] %s298
          %304 = dma.hbm_to_vmem [thread:$0]  %s297, 512, %s299, [#allocation6], 128, 128, 8
        $region32: #{tpu_custom_call.1} parent=11 // pred_fallthru
          _
        // Predicated region
        $region33: #{tpu_custom_call.1} parent=11 // pred_check
          %p305 = pneg %p147
        $region34: #{tpu_custom_call.1} parent=11 // pred_check_branch
          %307 = sbr.rel (%p305) target = $region36
        $region35: #{tpu_custom_call.1} parent=11 // pred_region
          %309 = vsyncadd [#allocation9], 0
          %s311 = sshll.u32 %s5, 4
          %s312 = int_to_ptr.hbm [resolvable:$true] %s311
          %s313 = sshll.u32 [#allocation8], 4
          %s314 = int_to_ptr.vmem [resolvable:$true] %s313
          %316 = dma.hbm_to_vmem [thread:$0]  %s312, 16, %s314, [#allocation9]
        $region36: #{tpu_custom_call.1} parent=11 // pred_fallthru
          _
        // Predicated region
        $region37: #{tpu_custom_call.1} parent=11 // pred_check
          %p317 = pneg %p168
        $region38: #{tpu_custom_call.1} parent=11 // pred_check_branch
          %319 = sbr.rel (%p317) target = $region40
        $region39: #{tpu_custom_call.1} parent=11 // pred_region
          _
        $region40: #{tpu_custom_call.1} parent=11 // pred_fallthru
          _
      $region12: #{tpu_custom_call.1} parent=5 // pred_fallthru
        _
      %p320 = scmp.lt.s32.totalorder %s21, 4
      // Predicated region
      $region41: #{tpu_custom_call.1} parent=5 // pred_check
        %p321 = pneg %p320
      $region42: #{tpu_custom_call.1} parent=5 // pred_check_branch
        %323 = sbr.rel (%p321) target = $region44
      $region43: #{tpu_custom_call.1} parent=5 // pred_region
        // Predicated region
        $region45: #{tpu_custom_call.1} parent=43 // pred_check
          %p324 = pneg %p188
        $region46: #{tpu_custom_call.1} parent=43 // pred_check_branch
          %326 = sbr.rel (%p324) target = $region48
        $region47: #{tpu_custom_call.1} parent=43 // pred_region
          %s327 = sand.u32 %s21, 1
          %s328 = scalar_lea.sflag [#allocation3], %s327
          %s329 = sand.u32 %s178, 1
          %s330 = smul.addr %s329, 288
          %s331 = scalar_lea.vmem [#allocation10], %s330
          %s332 = smul.u32 18, %s21
          %334 = vsyncadd %s328, 0
          %s335 = smul.addr %s332, 4
          %s336 = scalar_lea.hbm %s7, %s335
          %s337 = sshll.u32 %s336, 4
          %s338 = int_to_ptr.hbm [resolvable:$true] %s337
          %s339 = sshll.u32 %s331, 4
          %s340 = int_to_ptr.vmem [resolvable:$true] %s339
          %345 = dma.hbm_to_vmem [thread:$0]  %s338, 4608, %s340, %s328, 4608, 1152, 72
        $region48: #{tpu_custom_call.1} parent=43 // pred_fallthru
          _
        // Predicated region
        $region49: #{tpu_custom_call.1} parent=43 // pred_check
          %p346 = pneg %p214
        $region50: #{tpu_custom_call.1} parent=43 // pred_check_branch
          %348 = sbr.rel (%p346) target = $region52
        $region51: #{tpu_custom_call.1} parent=43 // pred_region
          %s349 = sand.u32 %s21, 1
          %s350 = scalar_lea.sflag [#allocation3], %s349
          %s351 = sand.u32 %s204, 1
          %s352 = smul.addr %s351, 18
          %s353 = scalar_lea.vmem [#allocation11], %s352
          %s354 = smul.u32 18, %s21
          %356 = vsyncadd %s350, 0
          %s357 = scalar_lea.hbm %s8, %s354
          %s359 = sshll.u32 %s357, 4
          %s360 = int_to_ptr.hbm [resolvable:$true] %s359
          %s361 = sshll.u32 %s353, 4
          %s362 = int_to_ptr.vmem [resolvable:$true] %s361
          %364 = dma.hbm_to_vmem [thread:$0]  %s360, 288, %s362, %s350
        $region52: #{tpu_custom_call.1} parent=43 // pred_fallthru
          _
      $region44: #{tpu_custom_call.1} parent=5 // pred_fallthru
        _
      %p365 = scmp.le.s32.totalorder 1, %s21
      %p366 = scmp.lt.s32.totalorder %s21, 5
      %p367 = pnand %p365, %p366
      %p368 = pneg %p367
      // Predicated region
      $region53: #{tpu_custom_call.1} parent=5 // pred_check
        _
      $region54: #{tpu_custom_call.1} parent=5 // pred_check_branch
        %370 = sbr.rel (%p367) target = $region56
      $region55: #{tpu_custom_call.1} parent=5 // pred_region
        %s371 = ssub.s32 %s21, 1
        // Predicated region
        $region57: #{tpu_custom_call.1} parent=55 // pred_check
          %p372 = pneg %p84
        $region58: #{tpu_custom_call.1} parent=55 // pred_check_branch
          %374 = sbr.rel (%p372) target = $region60
        $region59: #{tpu_custom_call.1} parent=55 // pred_region
          %376 = dma.done [#allocation3], 64
        $region60: #{tpu_custom_call.1} parent=55 // pred_fallthru
          _
        // Predicated region
        $region61: #{tpu_custom_call.1} parent=55 // pred_check
          %p377 = pneg %p105
        $region62: #{tpu_custom_call.1} parent=55 // pred_check_branch
          %379 = sbr.rel (%p377) target = $region64
        $region63: #{tpu_custom_call.1} parent=55 // pred_region
          %381 = dma.done [#allocation6], 16
        $region64: #{tpu_custom_call.1} parent=55 // pred_fallthru
          _
        // Predicated region
        $region65: #{tpu_custom_call.1} parent=55 // pred_check
          %p382 = pneg %p126
        $region66: #{tpu_custom_call.1} parent=55 // pred_check_branch
          %384 = sbr.rel (%p382) target = $region68
        $region67: #{tpu_custom_call.1} parent=55 // pred_region
          %386 = dma.done [#allocation6], 512
        $region68: #{tpu_custom_call.1} parent=55 // pred_fallthru
          _
        // Predicated region
        $region69: #{tpu_custom_call.1} parent=55 // pred_check
          %p387 = pneg %p147
        $region70: #{tpu_custom_call.1} parent=55 // pred_check_branch
          %389 = sbr.rel (%p387) target = $region72
        $region71: #{tpu_custom_call.1} parent=55 // pred_region
          %391 = dma.done [#allocation9], 16
        $region72: #{tpu_custom_call.1} parent=55 // pred_fallthru
          _
        %s392 = sand.u32 %s26, 1
        %s393 = scalar_lea.sflag [#allocation3], %s392
        %s394 = sand.u32 %s181, 1
        %s395 = smul.addr %s394, 288
        %s396 = scalar_lea.vmem [#allocation10], %s395
        // Predicated region
        $region73: #{tpu_custom_call.1} parent=55 // pred_check
          %p397 = pneg %p194
        $region74: #{tpu_custom_call.1} parent=55 // pred_check_branch
          %399 = sbr.rel (%p397) target = $region76
        $region75: #{tpu_custom_call.1} parent=55 // pred_region
          %401 = dma.done %s393, 4608
        $region76: #{tpu_custom_call.1} parent=55 // pred_fallthru
          _
        %s402 = sand.u32 %s26, 1
        %s403 = scalar_lea.sflag [#allocation3], %s402
        %s404 = sand.u32 %s207, 1
        %s405 = smul.addr %s404, 18
        %s406 = scalar_lea.vmem [#allocation11], %s405
        // Predicated region
        $region77: #{tpu_custom_call.1} parent=55 // pred_check
          %p407 = pneg %p220
        $region78: #{tpu_custom_call.1} parent=55 // pred_check_branch
          %409 = sbr.rel (%p407) target = $region80
        $region79: #{tpu_custom_call.1} parent=55 // pred_region
          %411 = dma.done %s403, 288
        $region80: #{tpu_custom_call.1} parent=55 // pred_fallthru
          _
        %p412 = pneg %p42
        %p413 = pneg %p39
        %p414 = pneg %p63
        %p415 = pneg %p60
        %p416 = pneg %p84
        %p417 = pneg %p81
        %p418 = pneg %p105
        %p419 = pneg %p102
        %p420 = pneg %p126
        %p421 = pneg %p123
        %p422 = pneg %p147
        %p423 = pneg %p144
        %p424 = pneg %p168
        %p425 = pneg %p165
        %s426 = sand.u32 %s26, 1
        %s427 = scalar_lea.sflag [#allocation3], %s426
        %s428 = sand.u32 %s181, 1
        %s429 = smul.addr %s428, 288
        %s430 = scalar_lea.vmem [#allocation10], %s429
        %p431 = pneg %p194
        %p432 = pneg %p191
        %s433 = sand.u32 %s26, 1
        %s434 = scalar_lea.sflag [#allocation3], %s433
        %s435 = sand.u32 %s207, 1
        %s436 = smul.addr %s435, 18
        %s437 = scalar_lea.vmem [#allocation11], %s436
        %p438 = pneg %p220
        %p439 = pneg %p217
        %p440 = pneg %p246
        %p441 = pneg %p243
        %s442 = sand.u32 %s233, 1
        %s443 = scalar_lea.sflag [#allocation4], %s442
        %s444 = sand.u32 %s233, 1
        %s445 = smul.addr %s444, 144
        %s446 = scalar_lea.vmem [#allocation12], %s445
        %s447 = smul.u32 18, %s26
        %s448 = smul.u32 18, %s26
        %s449 = smul.u32 18, %s26
        %v451 = vld [vmem:[%s0] sm:$0xff]
        %v452 = vld [vmem:[%s0 + $0x8] sm:$0xff]
        %v453 = vld [vmem:[%s1] sm:$0xff]
        %v454 = vld [vmem:[%s1 + $0x8] sm:$0xff]
        %vm455 = vcmask 130048
        %v457 = vsel %vm455, %v451, 0
        %v460 = vsel %vm455, %v452, 0
        %462 = vmatpush.msra.mxu0 0.0
        %463 = vmatpush.msra.mxu0 0.0
        %464 = vmatpush.msra.mxu0 0.0
        %465 = vmatpush.msra.mxu0 0.0
        %466 = vmatpush.msra.mxu0 0.0
        %467 = vmatpush.msra.mxu0 0.0
        %468 = vmatpush.msra.mxu0 0.0
        %469 = vmatpush.msra.mxu0 0.0
        %470 = vmatpush.msra.mxu0 0.0
        %471 = vmatpush.msra.mxu0 0.0
        %472 = vmatpush.msra.mxu0 0.0
        %473 = vmatpush.msra.mxu0 0.0
        %474 = vmatpush.msra.mxu0 0.0
        %475 = vmatpush.msra.mxu0 0.0
        %476 = vmatpush.msra.mxu0 %v454
        %477 = vmatpush.msra.mxu0 %v453
        %478 = vmatmul.f32.gmra.mxu0 %v457
        %v479 = vpop.f32.mrf.mxu0
        %v480 = vadd.f32 0.0, %v479
        %481 = vmatmul.f32.gmra.mxu0 %v460
        %v482 = vpop.f32.mrf.mxu0
        %v483 = vadd.f32 0.0, %v482
        %484 = vdwg.mxu0
        %v485 = vld [vmem:[#allocation2] sm:$0xf]
        %v486 = vld [vmem:[#allocation5] sm:$0x1]
        %v488 = vperm.slane %v486, 0
        %vm490 = vcmask 31744
        %v492 = vsel %vm490, %v480, 0
        %v495 = vsel %vm490, %v483, 0
        %vm497 = vcmask 1043456
        %v499 = vsel %vm497, %v485, 0
        %501 = vmatpush.msra.mxu0 0.0
        %502 = vmatpush.msra.mxu0 0.0
        %503 = vmatpush.msra.mxu0 0.0
        %504 = vmatpush.msra.mxu0 0.0
        %505 = vmatpush.msra.mxu0 0.0
        %506 = vmatpush.msra.mxu0 0.0
        %507 = vmatpush.msra.mxu0 0.0
        %508 = vmatpush.msra.mxu0 0.0
        %509 = vmatpush.msra.mxu0 0.0
        %510 = vmatpush.msra.mxu0 0.0
        %511 = vmatpush.msra.mxu0 0.0
        %512 = vmatpush.msra.mxu0 0.0
        %513 = vmatpush.msra.mxu0 0.0
        %514 = vmatpush.msra.mxu0 0.0
        %515 = vmatpush.msra.mxu0 0.0
        %516 = vmatpush.msra.mxu0 %v499
        %517 = vmatmul.f32.gmra.mxu0 %v492
        %v518 = vpop.f32.mrf.mxu0
        %v519 = vadd.f32 %v488, %v518
        %520 = vmatmul.f32.gmra.mxu0 %v495
        %v521 = vpop.f32.mrf.mxu0
        %v522 = vadd.f32 %v488, %v521
        %523 = vdwg.mxu0
        %v524 = vmax.f32 %v519, 0.0
        %v525 = vmax.f32 %v522, 0.0
        %526 = vmatpush.msra.mxu0 0.0
        %527 = vmatpush.msra.mxu0 0.0
        %528 = vmatpush.msra.mxu0 0.0
        %529 = vmatpush.msra.mxu0 0.0
        %530 = vmatpush.msra.mxu0 0.0
        %531 = vmatpush.msra.mxu0 0.0
        %532 = vmatpush.msra.mxu0 0.0
        %533 = vmatpush.msra.mxu0 0.0
        %534 = vmatpush.msra.mxu0 0.0
        %535 = vmatpush.msra.mxu0 0.0
        %536 = vmatpush.msra.mxu0 0.0
        %537 = vmatpush.msra.mxu0 0.0
        %538 = vmatpush.msra.mxu0 0.0
        %539 = vmatpush.msra.mxu0 0.0
        %540 = vmatpush.msra.mxu0 %v525
        %541 = vmatpush.msra.mxu0 %v524
        %542 = vmatmul.f32.gmra.mxu0 %v457
        %v543 = vpop.f32.mrf.mxu0
        %v544 = vadd.f32 0.0, %v543
        %545 = vmatmul.f32.gmra.mxu0 %v460
        %v546 = vpop.f32.mrf.mxu0
        %v547 = vadd.f32 0.0, %v546
        %548 = vdwg.mxu0
        %v549 = vld [vmem:[#allocation7] sm:$0xff]
        %v550 = vld [vmem:[#allocation7 + $0x8] sm:$0xff]
        %v551 = vld [vmem:[#allocation7 + $0x10] sm:$0xff]
        %v552 = vld [vmem:[#allocation7 + $0x18] sm:$0xff]
        %v553 = vld [vmem:[#allocation8] sm:$0x1]
        %v555 = vperm.slane %v553, 0
        %vm557 = vcmask 261120
        %v559 = vsel %vm557, %v544, 0
        %v562 = vsel %vm557, %v547, 0
        %564 = vmatpush.msra.mxu0 0.0
        %565 = vmatpush.msra.mxu0 0.0
        %566 = vmatpush.msra.mxu0 0.0
        %567 = vmatpush.msra.mxu0 0.0
        %568 = vmatpush.msra.mxu0 0.0
        %569 = vmatpush.msra.mxu0 0.0
        %570 = vmatpush.msra.mxu0 0.0
        %571 = vmatpush.msra.mxu0 0.0
        %572 = vmatpush.msra.mxu0 0.0
        %573 = vmatpush.msra.mxu0 0.0
        %574 = vmatpush.msra.mxu0 0.0
        %575 = vmatpush.msra.mxu0 0.0
        %576 = vmatpush.msra.mxu0 %v552
        %577 = vmatpush.msra.mxu0 %v551
        %578 = vmatpush.msra.mxu0 %v550
        %579 = vmatpush.msra.mxu0 %v549
        %580 = vmatmul.f32.gmra.mxu0 %v559
        %v581 = vpop.f32.mrf.mxu0
        %v582 = vadd.f32 %v555, %v581
        %583 = vmatmul.f32.gmra.mxu0 %v562
        %v584 = vpop.f32.mrf.mxu0
        %v585 = vadd.f32 %v555, %v584
        %586 = vdwg.mxu0
        %v587 = vld [vmem:[%s6] sm:$0xff]
        %v589 = vsel %vm455, %v587, 0
        %591 = vmatpush.msra.mxu0 0.0
        %592 = vmatpush.msra.mxu0 0.0
        %593 = vmatpush.msra.mxu0 0.0
        %594 = vmatpush.msra.mxu0 0.0
        %595 = vmatpush.msra.mxu0 0.0
        %596 = vmatpush.msra.mxu0 0.0
        %597 = vmatpush.msra.mxu0 0.0
        %598 = vmatpush.msra.mxu0 0.0
        %599 = vmatpush.msra.mxu0 0.0
        %600 = vmatpush.msra.mxu0 0.0
        %601 = vmatpush.msra.mxu0 0.0
        %602 = vmatpush.msra.mxu0 0.0
        %603 = vmatpush.msra.mxu0 0.0
        %604 = vmatpush.msra.mxu0 0.0
        %605 = vmatpush.msra.mxu0 %v585
        %606 = vmatpush.msra.mxu0 %v582
        %607 = vmatmul.f32.gmra.mxu0 %v589
        %v608 = vpop.f32.mrf.mxu0
        %v609 = vadd.f32 0.0, %v608
        %610 = vdwg.mxu0
        %v611 = vpack.c.bf16 %v609, %v609
        %v612 = vld [vmem:[%s396] sm:$0xff]
        %v613 = vld [vmem:[%s396 + $0x8] sm:$0xff]
        %v614 = vld [vmem:[%s396 + $0x10] sm:$0xff]
        %v615 = vld [vmem:[%s396 + $0x18] sm:$0xff]
        %v616 = vld [vmem:[%s396 + $0x20] sm:$0xff]
        %v617 = vld [vmem:[%s396 + $0x28] sm:$0xff]
        %v618 = vld [vmem:[%s396 + $0x30] sm:$0xff]
        %v619 = vld [vmem:[%s396 + $0x38] sm:$0xff]
        %v620 = vld [vmem:[%s396 + $0x40] sm:$0xff]
        %v621 = vld [vmem:[%s396 + $0x48] sm:$0xff]
        %v622 = vld [vmem:[%s396 + $0x50] sm:$0xff]
        %v623 = vld [vmem:[%s396 + $0x58] sm:$0xff]
        %v624 = vld [vmem:[%s396 + $0x60] sm:$0xff]
        %v625 = vld [vmem:[%s396 + $0x68] sm:$0xff]
        %v626 = vld [vmem:[%s396 + $0x70] sm:$0xff]
        %v627 = vld [vmem:[%s396 + $0x78] sm:$0xff]
        %v628 = vld [vmem:[%s396 + $0x80] sm:$0xff]
        %v629 = vld [vmem:[%s396 + $0x88] sm:$0xff]
        %v630 = vld [vmem:[%s396 + $0x90] sm:$0xff]
        %v631 = vld [vmem:[%s396 + $0x98] sm:$0xff]
        %v632 = vld [vmem:[%s396 + $0xa0] sm:$0xff]
        %v633 = vld [vmem:[%s396 + $0xa8] sm:$0xff]
        %v634 = vld [vmem:[%s396 + $0xb0] sm:$0xff]
        %v635 = vld [vmem:[%s396 + $0xb8] sm:$0xff]
        %v636 = vld [vmem:[%s396 + $0xc0] sm:$0xff]
        %v637 = vld [vmem:[%s396 + $0xc8] sm:$0xff]
        %v638 = vld [vmem:[%s396 + $0xd0] sm:$0xff]
        %v639 = vld [vmem:[%s396 + $0xd8] sm:$0xff]
        %v640 = vld [vmem:[%s396 + $0xe0] sm:$0xff]
        %v641 = vld [vmem:[%s396 + $0xe8] sm:$0xff]
        %v642 = vld [vmem:[%s396 + $0xf0] sm:$0xff]
        %v643 = vld [vmem:[%s396 + $0xf8] sm:$0xff]
        %v644 = vld [vmem:[%s396 + $0x100] sm:$0xff]
        %v645 = vld [vmem:[%s396 + $0x108] sm:$0xff]
        %v646 = vld [vmem:[%s396 + $0x110] sm:$0xff]
        %v647 = vld [vmem:[%s396 + $0x118] sm:$0xff]
        %v648 = vld [vmem:[%s406] sm:$0xff]
        %v649 = vld [vmem:[%s406 + $0x8] sm:$0xff]
        %v650 = vld [vmem:[%s406 + $0x10] sm:$0x3]
        %v654 = vperm.slane %v648, 0
        %v655 = vperm.slane %v648, 1
        %v656 = vperm.slane %v648, 2
        %v657 = vperm.slane %v648, 3
        %v658 = vperm.slane %v648, 4
        %v659 = vperm.slane %v648, 5
        %v660 = vperm.slane %v648, 6
        %v661 = vperm.slane %v648, 7
        %v662 = vperm.slane %v649, 0
        %v663 = vperm.slane %v649, 1
        %v664 = vperm.slane %v649, 2
        %v665 = vperm.slane %v649, 3
        %v666 = vperm.slane %v649, 4
        %v667 = vperm.slane %v649, 5
        %v668 = vperm.slane %v649, 6
        %v669 = vperm.slane %v649, 7
        %v670 = vperm.slane %v650, 0
        %v671 = vperm.slane %v650, 1
        %v726 = vunpack.c.l.b16 %v612
        %v727 = vunpack.c.h.b16 %v612
        %v728 = vunpack.c.l.b16 %v613
        %v729 = vunpack.c.h.b16 %v613
        %v730 = vunpack.c.l.b16 %v614
        %v731 = vunpack.c.h.b16 %v614
        %v732 = vunpack.c.l.b16 %v615
        %v733 = vunpack.c.h.b16 %v615
        %v734 = vunpack.c.l.b16 %v616
        %v735 = vunpack.c.h.b16 %v616
        %v736 = vunpack.c.l.b16 %v617
        %v737 = vunpack.c.h.b16 %v617
        %v738 = vunpack.c.l.b16 %v618
        %v739 = vunpack.c.h.b16 %v618
        %v740 = vunpack.c.l.b16 %v619
        %v741 = vunpack.c.h.b16 %v619
        %v742 = vunpack.c.l.b16 %v620
        %v743 = vunpack.c.h.b16 %v620
        %v744 = vunpack.c.l.b16 %v621
        %v745 = vunpack.c.h.b16 %v621
        %v746 = vunpack.c.l.b16 %v622
        %v747 = vunpack.c.h.b16 %v622
        %v748 = vunpack.c.l.b16 %v623
        %v749 = vunpack.c.h.b16 %v623
        %v750 = vunpack.c.l.b16 %v624
        %v751 = vunpack.c.h.b16 %v624
        %v752 = vunpack.c.l.b16 %v625
        %v753 = vunpack.c.h.b16 %v625
        %v754 = vunpack.c.l.b16 %v626
        %v755 = vunpack.c.h.b16 %v626
        %v756 = vunpack.c.l.b16 %v627
        %v757 = vunpack.c.h.b16 %v627
        %v758 = vunpack.c.l.b16 %v628
        %v759 = vunpack.c.h.b16 %v628
        %v760 = vunpack.c.l.b16 %v629
        %v761 = vunpack.c.h.b16 %v629
        %v762 = vunpack.c.l.b16 %v630
        %v763 = vunpack.c.h.b16 %v630
        %v764 = vunpack.c.l.b16 %v631
        %v765 = vunpack.c.h.b16 %v631
        %v766 = vunpack.c.l.b16 %v632
        %v767 = vunpack.c.h.b16 %v632
        %v768 = vunpack.c.l.b16 %v633
        %v769 = vunpack.c.h.b16 %v633
        %v770 = vunpack.c.l.b16 %v634
        %v771 = vunpack.c.h.b16 %v634
        %v772 = vunpack.c.l.b16 %v635
        %v773 = vunpack.c.h.b16 %v635
        %v774 = vunpack.c.l.b16 %v636
        %v775 = vunpack.c.h.b16 %v636
        %v776 = vunpack.c.l.b16 %v637
        %v777 = vunpack.c.h.b16 %v637
        %v778 = vunpack.c.l.b16 %v638
        %v779 = vunpack.c.h.b16 %v638
        %v780 = vunpack.c.l.b16 %v639
        %v781 = vunpack.c.h.b16 %v639
        %v782 = vunpack.c.l.b16 %v640
        %v783 = vunpack.c.h.b16 %v640
        %v784 = vunpack.c.l.b16 %v641
        %v785 = vunpack.c.h.b16 %v641
        %v786 = vunpack.c.l.b16 %v642
        %v787 = vunpack.c.h.b16 %v642
        %v788 = vunpack.c.l.b16 %v643
        %v789 = vunpack.c.h.b16 %v643
        %v790 = vunpack.c.l.b16 %v644
        %v791 = vunpack.c.h.b16 %v644
        %v792 = vunpack.c.l.b16 %v645
        %v793 = vunpack.c.h.b16 %v645
        %v794 = vunpack.c.l.b16 %v646
        %v795 = vunpack.c.h.b16 %v646
        %v796 = vunpack.c.l.b16 %v647
        %v797 = vunpack.c.h.b16 %v647
        %v798 = vpack.c.b16 %v744, %v726
        %v799 = vpack.c.b16 %v745, %v727
        %v800 = vpack.c.b16 %v746, %v728
        %v801 = vpack.c.b16 %v747, %v729
        %v802 = vpack.c.b16 %v748, %v730
        %v803 = vpack.c.b16 %v749, %v731
        %v804 = vpack.c.b16 %v750, %v732
        %v805 = vpack.c.b16 %v751, %v733
        %v806 = vpack.c.b16 %v752, %v734
        %v807 = vpack.c.b16 %v753, %v735
        %v808 = vpack.c.b16 %v754, %v736
        %v809 = vpack.c.b16 %v755, %v737
        %v810 = vpack.c.b16 %v756, %v738
        %v811 = vpack.c.b16 %v757, %v739
        %v812 = vpack.c.b16 %v758, %v740
        %v813 = vpack.c.b16 %v759, %v741
        %v814 = vpack.c.b16 %v760, %v742
        %v815 = vpack.c.b16 %v761, %v743
        %v816 = vpack.c.b16 %v780, %v762
        %v817 = vpack.c.b16 %v781, %v763
        %v818 = vpack.c.b16 %v782, %v764
        %v819 = vpack.c.b16 %v783, %v765
        %v820 = vpack.c.b16 %v784, %v766
        %v821 = vpack.c.b16 %v785, %v767
        %v822 = vpack.c.b16 %v786, %v768
        %v823 = vpack.c.b16 %v787, %v769
        %v824 = vpack.c.b16 %v788, %v770
        %v825 = vpack.c.b16 %v789, %v771
        %v826 = vpack.c.b16 %v790, %v772
        %v827 = vpack.c.b16 %v791, %v773
        %v828 = vpack.c.b16 %v792, %v774
        %v829 = vpack.c.b16 %v793, %v775
        %v830 = vpack.c.b16 %v794, %v776
        %v831 = vpack.c.b16 %v795, %v777
        %v832 = vpack.c.b16 %v796, %v778
        %v833 = vpack.c.b16 %v797, %v779
        %v871 = vsel %vm557, %v611, 0
        %873 = vmatpush.bf16.msra.mxu0 0
        %874 = vmatpush.bf16.msra.mxu0 0
        %875 = vmatpush.bf16.msra.mxu0 0
        %876 = vmatpush.bf16.msra.mxu0 0
        %877 = vmatpush.bf16.msra.mxu0 0
        %878 = vmatpush.bf16.msra.mxu0 0
        %879 = vmatpush.bf16.msra.mxu0 %v816
        %880 = vmatpush.bf16.msra.mxu0 %v798
        %881 = vmatmul.bf16.gmra.mxu0 %v871
        %v882 = vpop.f32.mrf.mxu0
        %v883 = vadd.f32 %v654, %v882
        %v884 = vpop.f32.mrf.mxu0
        %885 = vdwg.mxu0
        %886 = vmatpush.bf16.msra.mxu0 0
        %887 = vmatpush.bf16.msra.mxu0 0
        %888 = vmatpush.bf16.msra.mxu0 0
        %889 = vmatpush.bf16.msra.mxu0 0
        %890 = vmatpush.bf16.msra.mxu0 0
        %891 = vmatpush.bf16.msra.mxu0 0
        %892 = vmatpush.bf16.msra.mxu0 %v817
        %893 = vmatpush.bf16.msra.mxu0 %v799
        %894 = vmatmul.bf16.gmra.mxu0 %v871
        %v895 = vpop.f32.mrf.mxu0
        %v896 = vadd.f32 %v655, %v895
        %v897 = vpop.f32.mrf.mxu0
        %898 = vdwg.mxu0
        %899 = vmatpush.bf16.msra.mxu0 0
        %900 = vmatpush.bf16.msra.mxu0 0
        %901 = vmatpush.bf16.msra.mxu0 0
        %902 = vmatpush.bf16.msra.mxu0 0
        %903 = vmatpush.bf16.msra.mxu0 0
        %904 = vmatpush.bf16.msra.mxu0 0
        %905 = vmatpush.bf16.msra.mxu0 %v818
        %906 = vmatpush.bf16.msra.mxu0 %v800
        %907 = vmatmul.bf16.gmra.mxu0 %v871
        %v908 = vpop.f32.mrf.mxu0
        %v909 = vadd.f32 %v656, %v908
        %v910 = vpop.f32.mrf.mxu0
        %911 = vdwg.mxu0
        %912 = vmatpush.bf16.msra.mxu0 0
        %913 = vmatpush.bf16.msra.mxu0 0
        %914 = vmatpush.bf16.msra.mxu0 0
        %915 = vmatpush.bf16.msra.mxu0 0
        %916 = vmatpush.bf16.msra.mxu0 0
        %917 = vmatpush.bf16.msra.mxu0 0
        %918 = vmatpush.bf16.msra.mxu0 %v819
        %919 = vmatpush.bf16.msra.mxu0 %v801
        %920 = vmatmul.bf16.gmra.mxu0 %v871
        %v921 = vpop.f32.mrf.mxu0
        %v922 = vadd.f32 %v657, %v921
        %v923 = vpop.f32.mrf.mxu0
        %924 = vdwg.mxu0
        %925 = vmatpush.bf16.msra.mxu0 0
        %926 = vmatpush.bf16.msra.mxu0 0
        %927 = vmatpush.bf16.msra.mxu0 0
        %928 = vmatpush.bf16.msra.mxu0 0
        %929 = vmatpush.bf16.msra.mxu0 0
        %930 = vmatpush.bf16.msra.mxu0 0
        %931 = vmatpush.bf16.msra.mxu0 %v820
        %932 = vmatpush.bf16.msra.mxu0 %v802
        %933 = vmatmul.bf16.gmra.mxu0 %v871
        %v934 = vpop.f32.mrf.mxu0
        %v935 = vadd.f32 %v658, %v934
        %v936 = vpop.f32.mrf.mxu0
        %937 = vdwg.mxu0
        %938 = vmatpush.bf16.msra.mxu0 0
        %939 = vmatpush.bf16.msra.mxu0 0
        %940 = vmatpush.bf16.msra.mxu0 0
        %941 = vmatpush.bf16.msra.mxu0 0
        %942 = vmatpush.bf16.msra.mxu0 0
        %943 = vmatpush.bf16.msra.mxu0 0
        %944 = vmatpush.bf16.msra.mxu0 %v821
        %945 = vmatpush.bf16.msra.mxu0 %v803
        %946 = vmatmul.bf16.gmra.mxu0 %v871
        %v947 = vpop.f32.mrf.mxu0
        %v948 = vadd.f32 %v659, %v947
        %v949 = vpop.f32.mrf.mxu0
        %950 = vdwg.mxu0
        %951 = vmatpush.bf16.msra.mxu0 0
        %952 = vmatpush.bf16.msra.mxu0 0
        %953 = vmatpush.bf16.msra.mxu0 0
        %954 = vmatpush.bf16.msra.mxu0 0
        %955 = vmatpush.bf16.msra.mxu0 0
        %956 = vmatpush.bf16.msra.mxu0 0
        %957 = vmatpush.bf16.msra.mxu0 %v822
        %958 = vmatpush.bf16.msra.mxu0 %v804
        %959 = vmatmul.bf16.gmra.mxu0 %v871
        %v960 = vpop.f32.mrf.mxu0
        %v961 = vadd.f32 %v660, %v960
        %v962 = vpop.f32.mrf.mxu0
        %963 = vdwg.mxu0
        %964 = vmatpush.bf16.msra.mxu0 0
        %965 = vmatpush.bf16.msra.mxu0 0
        %966 = vmatpush.bf16.msra.mxu0 0
        %967 = vmatpush.bf16.msra.mxu0 0
        %968 = vmatpush.bf16.msra.mxu0 0
        %969 = vmatpush.bf16.msra.mxu0 0
        %970 = vmatpush.bf16.msra.mxu0 %v823
        %971 = vmatpush.bf16.msra.mxu0 %v805
        %972 = vmatmul.bf16.gmra.mxu0 %v871
        %v973 = vpop.f32.mrf.mxu0
        %v974 = vadd.f32 %v661, %v973
        %v975 = vpop.f32.mrf.mxu0
        %976 = vdwg.mxu0
        %977 = vmatpush.bf16.msra.mxu0 0
        %978 = vmatpush.bf16.msra.mxu0 0
        %979 = vmatpush.bf16.msra.mxu0 0
        %980 = vmatpush.bf16.msra.mxu0 0
        %981 = vmatpush.bf16.msra.mxu0 0
        %982 = vmatpush.bf16.msra.mxu0 0
        %983 = vmatpush.bf16.msra.mxu0 %v824
        %984 = vmatpush.bf16.msra.mxu0 %v806
        %985 = vmatmul.bf16.gmra.mxu0 %v871
        %v986 = vpop.f32.mrf.mxu0
        %v987 = vadd.f32 %v662, %v986
        %v988 = vpop.f32.mrf.mxu0
        %989 = vdwg.mxu0
        %990 = vmatpush.bf16.msra.mxu0 0
        %991 = vmatpush.bf16.msra.mxu0 0
        %992 = vmatpush.bf16.msra.mxu0 0
        %993 = vmatpush.bf16.msra.mxu0 0
        %994 = vmatpush.bf16.msra.mxu0 0
        %995 = vmatpush.bf16.msra.mxu0 0
        %996 = vmatpush.bf16.msra.mxu0 %v825
        %997 = vmatpush.bf16.msra.mxu0 %v807
        %998 = vmatmul.bf16.gmra.mxu0 %v871
        %v999 = vpop.f32.mrf.mxu0
        %v1000 = vadd.f32 %v663, %v999
        %v1001 = vpop.f32.mrf.mxu0
        %1002 = vdwg.mxu0
        %1003 = vmatpush.bf16.msra.mxu0 0
        %1004 = vmatpush.bf16.msra.mxu0 0
        %1005 = vmatpush.bf16.msra.mxu0 0
        %1006 = vmatpush.bf16.msra.mxu0 0
        %1007 = vmatpush.bf16.msra.mxu0 0
        %1008 = vmatpush.bf16.msra.mxu0 0
        %1009 = vmatpush.bf16.msra.mxu0 %v826
        %1010 = vmatpush.bf16.msra.mxu0 %v808
        %1011 = vmatmul.bf16.gmra.mxu0 %v871
        %v1012 = vpop.f32.mrf.mxu0
        %v1013 = vadd.f32 %v664, %v1012
        %v1014 = vpop.f32.mrf.mxu0
        %1015 = vdwg.mxu0
        %1016 = vmatpush.bf16.msra.mxu0 0
        %1017 = vmatpush.bf16.msra.mxu0 0
        %1018 = vmatpush.bf16.msra.mxu0 0
        %1019 = vmatpush.bf16.msra.mxu0 0
        %1020 = vmatpush.bf16.msra.mxu0 0
        %1021 = vmatpush.bf16.msra.mxu0 0
        %1022 = vmatpush.bf16.msra.mxu0 %v827
        %1023 = vmatpush.bf16.msra.mxu0 %v809
        %1024 = vmatmul.bf16.gmra.mxu0 %v871
        %v1025 = vpop.f32.mrf.mxu0
        %v1026 = vadd.f32 %v665, %v1025
        %v1027 = vpop.f32.mrf.mxu0
        %1028 = vdwg.mxu0
        %1029 = vmatpush.bf16.msra.mxu0 0
        %1030 = vmatpush.bf16.msra.mxu0 0
        %1031 = vmatpush.bf16.msra.mxu0 0
        %1032 = vmatpush.bf16.msra.mxu0 0
        %1033 = vmatpush.bf16.msra.mxu0 0
        %1034 = vmatpush.bf16.msra.mxu0 0
        %1035 = vmatpush.bf16.msra.mxu0 %v828
        %1036 = vmatpush.bf16.msra.mxu0 %v810
        %1037 = vmatmul.bf16.gmra.mxu0 %v871
        %v1038 = vpop.f32.mrf.mxu0
        %v1039 = vadd.f32 %v666, %v1038
        %v1040 = vpop.f32.mrf.mxu0
        %1041 = vdwg.mxu0
        %1042 = vmatpush.bf16.msra.mxu0 0
        %1043 = vmatpush.bf16.msra.mxu0 0
        %1044 = vmatpush.bf16.msra.mxu0 0
        %1045 = vmatpush.bf16.msra.mxu0 0
        %1046 = vmatpush.bf16.msra.mxu0 0
        %1047 = vmatpush.bf16.msra.mxu0 0
        %1048 = vmatpush.bf16.msra.mxu0 %v829
        %1049 = vmatpush.bf16.msra.mxu0 %v811
        %1050 = vmatmul.bf16.gmra.mxu0 %v871
        %v1051 = vpop.f32.mrf.mxu0
        %v1052 = vadd.f32 %v667, %v1051
        %v1053 = vpop.f32.mrf.mxu0
        %1054 = vdwg.mxu0
        %1055 = vmatpush.bf16.msra.mxu0 0
        %1056 = vmatpush.bf16.msra.mxu0 0
        %1057 = vmatpush.bf16.msra.mxu0 0
        %1058 = vmatpush.bf16.msra.mxu0 0
        %1059 = vmatpush.bf16.msra.mxu0 0
        %1060 = vmatpush.bf16.msra.mxu0 0
        %1061 = vmatpush.bf16.msra.mxu0 %v830
        %1062 = vmatpush.bf16.msra.mxu0 %v812
        %1063 = vmatmul.bf16.gmra.mxu0 %v871
        %v1064 = vpop.f32.mrf.mxu0
        %v1065 = vadd.f32 %v668, %v1064
        %v1066 = vpop.f32.mrf.mxu0
        %1067 = vdwg.mxu0
        %1068 = vmatpush.bf16.msra.mxu0 0
        %1069 = vmatpush.bf16.msra.mxu0 0
        %1070 = vmatpush.bf16.msra.mxu0 0
        %1071 = vmatpush.bf16.msra.mxu0 0
        %1072 = vmatpush.bf16.msra.mxu0 0
        %1073 = vmatpush.bf16.msra.mxu0 0
        %1074 = vmatpush.bf16.msra.mxu0 %v831
        %1075 = vmatpush.bf16.msra.mxu0 %v813
        %1076 = vmatmul.bf16.gmra.mxu0 %v871
        %v1077 = vpop.f32.mrf.mxu0
        %v1078 = vadd.f32 %v669, %v1077
        %v1079 = vpop.f32.mrf.mxu0
        %1080 = vdwg.mxu0
        %1081 = vmatpush.bf16.msra.mxu0 0
        %1082 = vmatpush.bf16.msra.mxu0 0
        %1083 = vmatpush.bf16.msra.mxu0 0
        %1084 = vmatpush.bf16.msra.mxu0 0
        %1085 = vmatpush.bf16.msra.mxu0 0
        %1086 = vmatpush.bf16.msra.mxu0 0
        %1087 = vmatpush.bf16.msra.mxu0 %v832
        %1088 = vmatpush.bf16.msra.mxu0 %v814
        %1089 = vmatmul.bf16.gmra.mxu0 %v871
        %v1090 = vpop.f32.mrf.mxu0
        %v1091 = vadd.f32 %v670, %v1090
        %v1092 = vpop.f32.mrf.mxu0
        %1093 = vdwg.mxu0
        %1094 = vmatpush.bf16.msra.mxu0 0
        %1095 = vmatpush.bf16.msra.mxu0 0
        %1096 = vmatpush.bf16.msra.mxu0 0
        %1097 = vmatpush.bf16.msra.mxu0 0
        %1098 = vmatpush.bf16.msra.mxu0 0
        %1099 = vmatpush.bf16.msra.mxu0 0
        %1100 = vmatpush.bf16.msra.mxu0 %v833
        %1101 = vmatpush.bf16.msra.mxu0 %v815
        %1102 = vmatmul.bf16.gmra.mxu0 %v871
        %v1103 = vpop.f32.mrf.mxu0
        %v1104 = vadd.f32 %v671, %v1103
        %v1105 = vpop.f32.mrf.mxu0
        %1106 = vdwg.mxu0
        %1107 = vst [vmem:[%s446] sm:$0xff] %v883
        %1108 = vst [vmem:[%s446 + $0x8] sm:$0xff] %v896
        %1109 = vst [vmem:[%s446 + $0x10] sm:$0xff] %v909
        %1110 = vst [vmem:[%s446 + $0x18] sm:$0xff] %v922
        %1111 = vst [vmem:[%s446 + $0x20] sm:$0xff] %v935
        %1112 = vst [vmem:[%s446 + $0x28] sm:$0xff] %v948
        %1113 = vst [vmem:[%s446 + $0x30] sm:$0xff] %v961
        %1114 = vst [vmem:[%s446 + $0x38] sm:$0xff] %v974
        %1115 = vst [vmem:[%s446 + $0x40] sm:$0xff] %v987
        %1116 = vst [vmem:[%s446 + $0x48] sm:$0xff] %v1000
        %1117 = vst [vmem:[%s446 + $0x50] sm:$0xff] %v1013
        %1118 = vst [vmem:[%s446 + $0x58] sm:$0xff] %v1026
        %1119 = vst [vmem:[%s446 + $0x60] sm:$0xff] %v1039
        %1120 = vst [vmem:[%s446 + $0x68] sm:$0xff] %v1052
        %1121 = vst [vmem:[%s446 + $0x70] sm:$0xff] %v1065
        %1122 = vst [vmem:[%s446 + $0x78] sm:$0xff] %v1078
        %1123 = vst [vmem:[%s446 + $0x80] sm:$0xff] %v1091
        %1124 = vst [vmem:[%s446 + $0x88] sm:$0xff] %v1104
        %s1125 = sand.u32 %s233, 1
        %s1126 = scalar_lea.sflag [#allocation4], %s1125
        %s1127 = sand.u32 %s233, 1
        %s1128 = smul.addr %s1127, 144
        %s1129 = scalar_lea.vmem [#allocation12], %s1128
        // Predicated region
        $region81: #{tpu_custom_call.1} parent=55 // pred_check
          %p1130 = pneg %p243
        $region82: #{tpu_custom_call.1} parent=55 // pred_check_branch
          %1132 = sbr.rel (%p1130) target = $region84
        $region83: #{tpu_custom_call.1} parent=55 // pred_region
          %s1133 = smul.u32 18, %s26
          %1135 = vsyncadd %s1126, 0
          %s1136 = smul.addr %s1133, 8
          %s1137 = scalar_lea.hbm %s9, %s1136
          %s1139 = sshll.u32 %s1129, 4
          %s1140 = int_to_ptr.vmem [resolvable:$true] %s1139
          %s1141 = sshll.u32 %s1137, 4
          %s1142 = int_to_ptr.hbm [resolvable:$true] %s1141
          %1144 = dma.vmem_to_hbm [thread:$0]  %s1140, 2304, %s1142, %s1126
        $region84: #{tpu_custom_call.1} parent=55 // pred_fallthru
          _
      $region56: #{tpu_custom_call.1} parent=5 // pred_fallthru
        _
      %p1145 = scmp.le.s32.totalorder 2, %s21
      // Predicated region
      $region85: #{tpu_custom_call.1} parent=5 // pred_check
        %p1146 = pneg %p1145
      $region86: #{tpu_custom_call.1} parent=5 // pred_check_branch
        %1148 = sbr.rel (%p1146) target = $region88
      $region87: #{tpu_custom_call.1} parent=5 // pred_region
        %s1149 = ssub.s32 %s21, 2
        // Predicated region
        $region89: #{tpu_custom_call.1} parent=87 // pred_check
          %p1150 = pneg %p249
        $region90: #{tpu_custom_call.1} parent=87 // pred_check_branch
          %1152 = sbr.rel (%p1150) target = $region92
        $region91: #{tpu_custom_call.1} parent=87 // pred_region
          %s1153 = sand.u32 %s234, 1
          %s1154 = scalar_lea.sflag [#allocation4], %s1153
          %s1155 = sand.u32 %s234, 1
          %s1156 = smul.addr %s1155, 144
          %s1157 = scalar_lea.vmem [#allocation12], %s1156
          %1159 = dma.done %s1154, 2304
        $region92: #{tpu_custom_call.1} parent=87 // pred_fallthru
          _
      $region88: #{tpu_custom_call.1} parent=5 // pred_fallthru
        _
    $region6: #{tpu_custom_call.1} parent=1 // loop_footer
      %s25 = sadd.s32 1, %s21
    $region7: #{tpu_custom_call.1} parent=1 // loop_footer_branch
      %20 = sbr.rel target = $region3
    $region8: #{tpu_custom_call.1} parent=1 // loop_exit
      _
    %1160 = vsyncpa [#allocation3], 1
    %s1161 = scalar_lea.sflag [#allocation3], 1
    %1162 = vsyncpa %s1161, 1
    %1163 = vsyncpa [#allocation6], 1
    %1164 = vsyncpa [#allocation9], 1
    %1165 = vsyncpa [#allocation4], 1
    %s1166 = scalar_lea.sflag [#allocation4], 1
    %1167 = vsyncpa %s1166, 1

</llo_original>
